<compile_context>
chip_gen: v5e
topology: v5e:2x2
jax: 0.10.0
libtpu: 0.0.40
codegen_flags: <defaults>
</compile_context>

<pallas_src>
import functools

import jax
import jax.numpy as jnp
from jax import lax
from jax.experimental import pallas as pl
from jax.experimental.pallas import tpu as pltpu


# --------------------------------------------------------------------------
# pltpu.roll direction probe (resolved eagerly, cached per device kind)
# --------------------------------------------------------------------------

_ROLL_CACHE = {}  # device_kind -> bool


def _roll_matches_jnp():
    """True iff pltpu.roll(x, s)[i] == x[(i - s) % n]  (jnp.roll convention)."""
    key = jax.devices()[0].device_kind
    if key not in _ROLL_CACHE:
        def probe_kernel(x_ref, o_ref):
            o_ref[...] = pltpu.roll(x_ref[...], 1, 1)

        xv = jnp.broadcast_to(jnp.arange(128, dtype=jnp.float32)[None, :], (8, 128))
        out = pl.pallas_call(
            probe_kernel,
            out_shape=jax.ShapeDtypeStruct((8, 128), jnp.float32),
        )(xv)
        _ROLL_CACHE[key] = bool(out[0, 0] == 127.0)
    return _ROLL_CACHE[key]


def _shift_up_lanes(v, s, roll_matches_jnp):
    """Returns w with w[..., p] = v[..., (p + s) % n] (shift toward lower index)."""
    if s == 0:
        return v
    n = v.shape[-1]
    shift = (n - s) if roll_matches_jnp else s
    return pltpu.roll(v, shift, v.ndim - 1)


# --------------------------------------------------------------------------
# Fused kernel: conv1 + ReLU + maxpool + dens1 + ReLU + dens2  (B images/step)
# --------------------------------------------------------------------------

@functools.lru_cache(maxsize=None)
def _make_fused_kernel(roll_matches_jnp):
    def kernel(x_ref, wc_ref, bc_ref, w1_ref, b1_ref, w2_ref, b2_ref,
               o_ref, taps_ref, act_ref):
        x = x_ref[...]                                    # (B, 3, 1024) f32, p = h*32+w
        B = x.shape[0]
        cdt = w1_ref.dtype                                # matmul operand dtype (f32/bf16)

        # conv1 (3x3 valid): 27 lane-shifted taps, staged in VMEM, then ONE
        # K=27 batched MXU matmul: B x (10,27)@(27,1024) -> (B,10,1024) f32.
        for kh in range(3):
            for kw in range(3):
                t = kh * 3 + kw
                tap = _shift_up_lanes(x, kh * 32 + kw, roll_matches_jnp)
                taps_ref[:, 3 * t:3 * t + 3, :] = tap.astype(cdt)
        wc_b = jnp.broadcast_to(wc_ref[...][None, :, :], (B, 10, 27))
        conv = jnp.einsum("bok,bkp->bop", wc_b, taps_ref[...],
                          preferred_element_type=jnp.float32)       # (B,10,1024) f32

        # 2x2/2 max-pool via three more lane shifts (flat offsets 1, 32, 33),
        # then conv bias + ReLU (commute with max for a per-channel constant).
        # Valid pooled values sit at p = 2i*32 + 2j; every other position is
        # garbage that the scattered dens1 weight zeroes out.
        m = conv
        for off in (1, 32, 33):
            m = jnp.maximum(m, _shift_up_lanes(conv, off, roll_matches_jnp))
        act_ref[...] = jnp.maximum(m + bc_ref[...][None, :, :], 0.0).astype(cdt)

        # dens1: per conv channel, (B,1024)@(1024,100) with batch on M.  W1 was
        # pre-scattered to the (channel, flat 32x32 position, 100) layout, so no
        # runtime flatten / transpose / gather is needed.
        h = jnp.zeros((B, 100), jnp.float32)
        for c in range(10):
            h = h + jnp.dot(act_ref[:, c, :], w1_ref[c],
                            preferred_element_type=jnp.float32)
        h = jnp.maximum(h + b1_ref[...], 0.0)
        # TODO(synk): Dropout(0.1) is identity in eval mode; training-mode mask
        # not implemented.

        # dens2 (classes zero-padded to 128 lanes -> lane-dense output store).
        o_ref[...] = jnp.dot(h.astype(cdt), w2_ref[...],
                             preferred_element_type=jnp.float32) + b2_ref[...]
    return kernel


# --------------------------------------------------------------------------
# One-time parameter preprocessing (hoisted out of the forward pass)
# --------------------------------------------------------------------------

def prepare_params(params, weights_dtype=jnp.float32):
    Wc = jnp.asarray(params["conv_w"], jnp.float32)     # (10, 3, 3, 3)
    bc = jnp.asarray(params["conv_b"], jnp.float32)     # (10,)
    W1 = jnp.asarray(params["d1_w"], jnp.float32)       # (100, 2250)
    b1 = jnp.asarray(params["d1_b"], jnp.float32)       # (100,)
    W2 = jnp.asarray(params["d2_w"], jnp.float32)       # (10, 100)
    b2 = jnp.asarray(params["d2_b"], jnp.float32)       # (10,)

    # Conv weights regrouped so column k = (kh*3 + kw)*3 + c matches the tap order.
    wc27 = Wc.transpose(0, 2, 3, 1).reshape(10, 27).astype(weights_dtype)
    bc_col = bc.reshape(10, 1)                           # f32 (elementwise path)

    # Fold the NCHW flatten + pooled-position compaction into dens1's weight:
    # W1_mod[c, 2i*32 + 2j, k] = W1[k, c*225 + i*15 + j], zeros elsewhere.
    W1_r = W1.reshape(100, 10, 15, 15).transpose(1, 2, 3, 0)        # (10,15,15,100)
    W1_mod = jnp.zeros((10, 32, 32, 100), jnp.float32)
    W1_mod = W1_mod.at[:, 0:30:2, 0:30:2, :].set(W1_r)
    W1_mod = W1_mod.reshape(10, 1024, 100).astype(weights_dtype)

    # dens2: transpose + zero-pad classes 10 -> 128 for a lane-dense output store.
    W2p = jnp.zeros((100, 128), weights_dtype).at[:, :10].set(W2.T.astype(weights_dtype))
    b2p = jnp.zeros((1, 128), jnp.float32).at[:, :10].set(b2.reshape(1, 10))

    return {"wc": wc27, "bc": bc_col, "w1": W1_mod, "b1": b1.reshape(1, 100),
            "w2": W2p, "b2": b2p}


# --------------------------------------------------------------------------
# Forward wrapper
# --------------------------------------------------------------------------

def cifar_cnn_forward(x, prepped, block_b=64):
    """x: (N, 3, 32, 32) float32 (PyTorch NCHW).  Returns (N, 10) float32 logits.

    block_b: images per grid step.  ~64 fits comfortably in 48 MiB VMEM with f32
    weights; raise to 128-256 on v5e/v6e (128 MiB VMEM), keep <=128 or use
    weights_dtype=bfloat16 on v7x (64 MiB VMEM).
    """
    roll_matches_jnp = _roll_matches_jnp()   # resolve roll sign before tracing
    N = x.shape[0]
    bb = max(8, min(int(block_b), N))
    bb = ((bb + 7) // 8) * 8                 # keep output blocks sublane-aligned
    n_pad = ((N + bb - 1) // bb) * bb

    # Flat lane-dense image rows: p = h*32 + w (metadata reshape only).
    x_flat = x.reshape(N, 3, 1024).astype(jnp.float32)
    if n_pad != N:
        x_flat = jnp.pad(x_flat, ((0, n_pad - N), (0, 0), (0, 0)))

    wdt = prepped["w1"].dtype
    kernel = _make_fused_kernel(roll_matches_jnp)

    out = pl.pallas_call(
        kernel,
        out_shape=jax.ShapeDtypeStruct((n_pad, 128), jnp.float32),
        grid=(n_pad // bb,),
        in_specs=[
            pl.BlockSpec((bb, 3, 1024), lambda i: (i, 0, 0)),     # image block i
            pl.BlockSpec((10, 27), lambda i: (0, 0)),             # conv weights (constant)
            pl.BlockSpec((10, 1), lambda i: (0, 0)),              # conv bias
            pl.BlockSpec((10, 1024, 100), lambda i: (0, 0, 0)),   # scattered dens1 W
            pl.BlockSpec((1, 100), lambda i: (0, 0)),             # dens1 bias
            pl.BlockSpec((100, 128), lambda i: (0, 0)),           # dens2 W (class-padded)
            pl.BlockSpec((1, 128), lambda i: (0, 0)),             # dens2 bias (padded)
        ],
        out_specs=pl.BlockSpec((bb, 128), lambda i: (i, 0)),
        scratch_shapes=[
            pltpu.VMEM((bb, 27, 1024), wdt),   # fused K=27 conv taps
            pltpu.VMEM((bb, 10, 1024), wdt),   # pooled + ReLU activations
        ],
        compiler_params=pltpu.CompilerParams(
            dimension_semantics=("parallel",),     # megacore sharding over blocks
            vmem_limit_bytes=48 * 1024 * 1024,
        ),
    )(x_flat, prepped["wc"], prepped["bc"], prepped["w1"], prepped["b1"],
      prepped["w2"], prepped["b2"])

    return out[:N, :10]


# --------------------------------------------------------------------------
# Pure-JAX reference (PyTorch semantics, eval mode)
# --------------------------------------------------------------------------

def reference_forward(x, params):
    Wc, bc = params["conv_w"], params["conv_b"]
    W1, b1 = params["d1_w"], params["d1_b"]
    W2, b2 = params["d2_w"], params["d2_b"]
    conv = lax.conv_general_dilated(x, Wc, window_strides=(1, 1), padding="VALID",
                                    dimension_numbers=("NCHW", "OIHW", "NCHW"))
    conv = jnp.maximum(conv + bc[None, :, None, None], 0.0)
    pooled = lax.reduce_window(conv, -jnp.inf, lax.max, (1, 1, 2, 2), (1, 1, 2, 2), "VALID")
    flat = pooled.reshape(x.shape[0], -1)
    h = jnp.maximum(flat @ W1.T + b1, 0.0)
    return h @ W2.T + b2


if __name__ == "__main__":
    key = jax.random.PRNGKey(0)
    kx, k1, k2, k3, k4, k5, k6 = jax.random.split(key, 7)

    # The 2250-wide Linear forces 32x32 spatial input.  N=13 is deliberately not
    # a multiple of the image block so the batch-padding path is exercised too.
    N = 13
    x = jax.random.normal(kx, (N, 3, 32, 32), dtype=jnp.float32)

    params = {
        "conv_w": jax.random.normal(k1, (10, 3, 3, 3), jnp.float32) * 0.1,
        "conv_b": jax.random.normal(k2, (10,), jnp.float32) * 0.1,
        "d1_w": jax.random.normal(k3, (100, 2250), jnp.float32) * 0.02,
        "d1_b": jax.random.normal(k4, (100,), jnp.float32) * 0.02,
        "d2_w": jax.random.normal(k5, (10, 100), jnp.float32) * 0.1,
        "d2_b": jax.random.normal(k6, (10,), jnp.float32) * 0.1,
    }

    ref = jax.block_until_ready(reference_forward(x, params))

    # f32 weights: exact-semantics path (block of 8 images per grid step -> grid=(2,)).
    prepped = prepare_params(params)                       # one-time prep (hoisted)
    out = jax.block_until_ready(cifar_cnn_forward(x, prepped, block_b=8))
    assert out.shape == (N, 10), out.shape
    assert jnp.allclose(out, ref, atol=2e-3, rtol=2e-3), float(jnp.max(jnp.abs(out - ref)))

    # bf16 weights/operands (f32 accumulation): reduced-precision fast path.
    prepped_bf16 = prepare_params(params, weights_dtype=jnp.bfloat16)
    out_bf16 = jax.block_until_ready(cifar_cnn_forward(x, prepped_bf16, block_b=8))
    assert out_bf16.shape == (N, 10), out_bf16.shape
    assert jnp.allclose(out_bf16, ref, atol=1e-1, rtol=1e-1), \
        float(jnp.max(jnp.abs(out_bf16 - ref)))

    print("KERNEL_OK")
</pallas_src>

<mosaic_0001>
module attributes {stable_mosaic.version = 11 : i64} {
  func.func @probe_kernel(%arg0: memref<8x128xf32, #tpu.memory_space<vmem>>, %arg1: memref<8x128xf32, #tpu.memory_space<vmem>>) attributes {dimension_semantics = [], scalar_prefetch = 0 : i64, scratch_operands = 0 : i64, tpu.core_type = #tpu.core_type<tc>} {
    %c0 = arith.constant 0 : index
    %c0_0 = arith.constant 0 : index
    %0 = vector.load %arg0[%c0, %c0_0] : memref<8x128xf32, #tpu.memory_space<vmem>>, vector<8x128xf32>
    %c1_i32 = arith.constant 1 : i32
    %1 = tpu.dynamic_rotate %0 by %c1_i32 dim 1 : vector<8x128xf32>, i32 -> vector<8x128xf32>
    %c0_1 = arith.constant 0 : index
    %c0_2 = arith.constant 0 : index
    %2 = vector.load %arg1[%c0_1, %c0_2] : memref<8x128xf32, #tpu.memory_space<vmem>>, vector<8x128xf32>
    tpu.vector_store %arg1[%c0_1, %c0_2], %1 {strides = array<i32>} : memref<8x128xf32, #tpu.memory_space<vmem>>, vector<8x128xf32>,
    return
  }
}

</mosaic_0001>

<llo_original>
// kernel: tpu_custom_call.1
$region0: #{tpu_custom_call.1}
  #allocation0 [shape = 'u32[]', space=smem, size = 0x4, offset = 0x4, fixed_abs, tag = 'smem constant byte address 0x4 - core index']
  #allocation1 [shape = 'u32[72,128]{1,0:T(1,128)}', space=vmem, size = 0x9000, scoped, tag = 'internal scratch']
  %s0 = inlined_call_operand.hbm [shape: f32[8,128], index: 0, kind: input, shape index: {}]
  %s1 = inlined_call_operand.hbm [shape: f32[8,128], index: 1, kind: output, shape index: {}]
  %s2 = sld [smem:[#allocation0]]
  $region18: #{tpu_custom_call.1} parent=0
    _
  %s4 = ssub.s32 1, %s2
  %s5 = scalar_select 0, %s4, %s2
  $region1: #{tpu_custom_call.1} parent=0
    #allocation2 [shape = 'u8[4096]{0}', space=vmem, size = 0x1000, scoped, tag = 'input window, operand 0, single buffered']
    #allocation3 [shape = 's32[1]{0}', space=sflag, size = 0x4, scoped, tag = 'scoped memory for tpu_custom_call.1']
    #allocation4 [shape = 's32[1]{0}', space=sflag, size = 0x4, scoped, tag = 'scoped memory for tpu_custom_call.1']
    #allocation5 [shape = 'u8[4096]{0}', space=vmem, size = 0x1000, scoped, tag = 'output window, operand 0, single buffered']
    %6 = vsyncpa [#allocation3], 0
    %7 = vsyncpa [#allocation4], 0
    // Predicated region
    $region2: #{tpu_custom_call.1} parent=1 // pred_check
      _
    $region3: #{tpu_custom_call.1} parent=1 // pred_check_branch
      %9 = sbr.rel (0) target = $region5
    $region4: #{tpu_custom_call.1} parent=1 // pred_region
      %11 = vsyncadd [#allocation3], 0
      %s13 = sshll.u32 %s0, 4
      %s14 = int_to_ptr.hbm [resolvable:$true] %s13
      %s15 = sshll.u32 [#allocation2], 4
      %s16 = int_to_ptr.vmem [resolvable:$true] %s15
      %18 = dma.hbm_to_vmem [thread:$0]  %s14, 128, %s16, [#allocation3]
    $region5: #{tpu_custom_call.1} parent=1 // pred_fallthru
      _
    // Predicated region
    $region6: #{tpu_custom_call.1} parent=1 // pred_check
      _
    $region7: #{tpu_custom_call.1} parent=1 // pred_check_branch
      %20 = sbr.rel (0) target = $region9
    $region8: #{tpu_custom_call.1} parent=1 // pred_region
      %22 = dma.done [#allocation3], 128
    $region9: #{tpu_custom_call.1} parent=1 // pred_fallthru
      _
    %v23 = vld [vmem:[#allocation2] sm:$0xff]
    %24 = vrot.lane.b32.xlu0 %v23, 1
    %v25 = vpop.permute.xlu0 %24
    %26 = vst [vmem:[#allocation5] sm:$0xff] %v25
    // Predicated region
    $region10: #{tpu_custom_call.1} parent=1 // pred_check
      _
    $region11: #{tpu_custom_call.1} parent=1 // pred_check_branch
      %28 = sbr.rel (0) target = $region13
    $region12: #{tpu_custom_call.1} parent=1 // pred_region
      %30 = vsyncadd [#allocation4], 0
      %s32 = sshll.u32 [#allocation5], 4
      %s33 = int_to_ptr.vmem [resolvable:$true] %s32
      %s34 = sshll.u32 %s1, 4
      %s35 = int_to_ptr.hbm [resolvable:$true] %s34
      %37 = dma.vmem_to_hbm [thread:$0]  %s33, 128, %s35, [#allocation4]
    $region13: #{tpu_custom_call.1} parent=1 // pred_fallthru
      _
    // Predicated region
    $region14: #{tpu_custom_call.1} parent=1 // pred_check
      _
    $region15: #{tpu_custom_call.1} parent=1 // pred_check_branch
      %39 = sbr.rel (0) target = $region17
    $region16: #{tpu_custom_call.1} parent=1 // pred_region
      %41 = dma.done [#allocation4], 128
    $region17: #{tpu_custom_call.1} parent=1 // pred_fallthru
      _
    %42 = vsyncpa [#allocation3], 1
    %43 = vsyncpa [#allocation4], 1

</llo_original>
